<compile_context>
chip_gen: v7x
topology: tpu7x:2x2x1
jax: 0.10.0
libtpu: 0.0.40
codegen_flags: <defaults>
</compile_context>

<pallas_src>
from typing import NamedTuple

import jax
import jax.numpy as jnp
from jax.experimental import pallas as pl
from jax.experimental.pallas import tpu as pltpu

EPS = 0.003
LANE = 128
SUBLANE = 8
DEFAULT_TILE_N = 1024


def _round_up(x, m):
    return ((x + m - 1) // m) * m


class PreparedActorParams(NamedTuple):
    """Lane-padded (and optionally bf16-cast) weights, ready for actor_forward."""
    w1: jax.Array
    b1: jax.Array
    w2: jax.Array
    b2: jax.Array
    w3: jax.Array
    b3: jax.Array
    w4: jax.Array
    b4: jax.Array
    a_dim: int  # original (unpadded) action dim


def prepare_actor_params(params, *, use_bf16=False):
    """One-time weight prep; call once and reuse across actor_forward calls.

    * Pads every layer's output-feature dim up to a multiple of 128 lanes
      (zero columns in W/b, matching zero rows in the next W).  relu(0)=0 and
      tanh(0)*a_lim=0, so the padded columns are exact zeros and the maths is
      unchanged; the wrapper slices them off.
    * Optionally casts weights to bf16 once (MXU-native inputs); biases stay
      f32 since they are added to the f32 MXU accumulator.
    """
    w1, b1, w2, b2, w3, b3, w4, b4 = params
    a_dim = int(w4.shape[1])

    ws = [w1, w2, w3, w4]
    bs = [b1, b2, b3, b4]

    def pad_out(w, b, out_pad):
        out = w.shape[1]
        if out == out_pad:
            return w, b
        w = jnp.zeros((w.shape[0], out_pad), w.dtype).at[:, :out].set(w)
        b = jnp.zeros((1, out_pad), b.dtype).at[:, :out].set(b)
        return w, b

    def pad_in(w, in_pad):
        if w.shape[0] == in_pad:
            return w
        return jnp.zeros((in_pad, w.shape[1]), w.dtype).at[:w.shape[0], :].set(w)

    for i in range(4):
        out_pad = _round_up(max(ws[i].shape[1], LANE), LANE)
        ws[i], bs[i] = pad_out(ws[i], bs[i], out_pad)
        if i + 1 < 4:
            ws[i + 1] = pad_in(ws[i + 1], out_pad)

    if use_bf16:
        ws = [w.astype(jnp.bfloat16) for w in ws]

    return PreparedActorParams(ws[0], bs[0], ws[1], bs[1],
                               ws[2], bs[2], ws[3], bs[3], a_dim)


def _actor_kernel(a_lim_ref,
                  s_ref,
                  w1_ref, b1_ref,
                  w2_ref, b2_ref,
                  w3_ref, b3_ref,
                  w4_ref, b4_ref,
                  out_ref):
    """One batch tile: 4 MXU matmuls + relu/relu/relu/tanh, all operands in VMEM."""
    cdt = w1_ref.dtype  # compute dtype follows the (pre-cast) weights

    def dense(x, w_ref, b_ref):
        # MXU matmul (weights already in compute dtype -> no per-step casts),
        # f32 accumulate, f32 bias add.
        return jnp.dot(x.astype(cdt), w_ref[...],
                       preferred_element_type=jnp.float32) + b_ref[...]

    h1 = jnp.maximum(dense(s_ref[...], w1_ref, b1_ref), 0.0)
    h2 = jnp.maximum(dense(h1, w2_ref, b2_ref), 0.0)
    h3 = jnp.maximum(dense(h2, w3_ref, b3_ref), 0.0)
    a = jnp.tanh(dense(h3, w4_ref, b4_ref))
    out_ref[...] = (a * a_lim_ref[0, 0]).astype(out_ref.dtype)


def actor_forward(s, params, a_lim, *, tile_n=DEFAULT_TILE_N,
                  use_bf16=False, store_bf16=False):
    """Actor forward pass with a batch-tiled pallas_call.

    `params` may be the raw tuple from init_actor_params (prep happens inline)
    or a PreparedActorParams (prep hoisted out of the per-call graph).
    """
    if not isinstance(params, PreparedActorParams):
        params = prepare_actor_params(params, use_bf16=use_bf16)
    w1, b1, w2, b2, w3, b3, w4, b4, a_dim = params

    n, s_dim = s.shape
    a_pad = w4.shape[1]

    # Tiny-batch path: round up to one full 8-row sublane tile (negligible copy).
    n_eff = n
    if n < SUBLANE:
        s = jnp.zeros((SUBLANE, s_dim), s.dtype).at[:n, :].set(s)
        n_eff = SUBLANE

    # Batch tile choice: single tile for small/medium n; for n > tile_n cap the
    # tile so the grid has >= 2 steps (v7x megacore gets work on both TCs).
    if n_eff <= tile_n:
        eff_tile = _round_up(n_eff, SUBLANE)
    else:
        eff_tile = min(tile_n, _round_up(pl.cdiv(n_eff, 2), 256))
    grid = (pl.cdiv(n_eff, eff_tile),)

    # a_lim as an SMEM scalar -> jit-safe even if a_lim is a traced value.
    a_lim_arr = jnp.asarray(a_lim, dtype=jnp.float32).reshape(1, 1)
    smem_scalar_spec = pl.BlockSpec((1, 1), lambda i: (0, 0),
                                    memory_space=pltpu.MemorySpace.SMEM)

    def resident(arr):
        # Full array as one block, same block index every grid step
        # -> DMA'd once, stays resident in VMEM.
        return pl.BlockSpec(arr.shape, lambda i: (0, 0))

    in_specs = [
        smem_scalar_spec,                                    # a_lim
        pl.BlockSpec((eff_tile, s_dim), lambda i: (i, 0)),   # s (pipelined)
        resident(w1), resident(b1),
        resident(w2), resident(b2),
        resident(w3), resident(b3),
        resident(w4), resident(b4),
    ]
    out_dtype = jnp.bfloat16 if store_bf16 else jnp.float32
    out_spec = pl.BlockSpec((eff_tile, a_pad), lambda i: (i, 0))

    dims = [w1.shape[0], w1.shape[1], w2.shape[1], w3.shape[1], w4.shape[1]]
    weight_bytes = sum(int(a.size) * a.dtype.itemsize
                       for a in (w1, b1, w2, b2, w3, b3, w4, b4))
    cost = pl.CostEstimate(
        flops=2 * n_eff * sum(dims[i] * dims[i + 1] for i in range(4)),
        transcendentals=n_eff * a_pad,
        bytes_accessed=(n_eff * s_dim * s.dtype.itemsize
                        + n_eff * a_pad * jnp.dtype(out_dtype).itemsize
                        + weight_bytes),
    )

    out_padded = pl.pallas_call(
        _actor_kernel,
        out_shape=jax.ShapeDtypeStruct((n_eff, a_pad), out_dtype),
        grid=grid,
        in_specs=in_specs,
        out_specs=out_spec,
        compiler_params=pltpu.CompilerParams(
            dimension_semantics=("parallel",)),
        cost_estimate=cost,
    )(a_lim_arr, s, w1, b1, w2, b2, w3, b3, w4, b4)

    out = out_padded[:n, :a_dim]
    return out.astype(jnp.float32) if store_bf16 else out


def init_actor_params(key, s_dim, a_dim):
    """Deterministic init mirroring the PyTorch module.

    fanin_init uses v = 1/sqrt(size[0]) on a PyTorch weight of shape [out, in],
    i.e. bound = 1/sqrt(out_features). fc4 weights ~ U(-EPS, EPS). Biases use
    nn.Linear's default U(-1/sqrt(in_features), 1/sqrt(in_features)).
    Weights here are stored transposed: [in_features, out_features].
    """
    dims = [s_dim, 256, 128, 64, a_dim]
    keys = jax.random.split(key, 8)
    params = []
    for i in range(4):
        fan_in, fan_out = dims[i], dims[i + 1]
        if i < 3:
            w_bound = 1.0 / jnp.sqrt(jnp.float32(fan_out))  # fanin_init quirk: size[0]=out
        else:
            w_bound = EPS
        b_bound = 1.0 / jnp.sqrt(jnp.float32(fan_in))
        w = jax.random.uniform(keys[2 * i], (fan_in, fan_out),
                               minval=-w_bound, maxval=w_bound, dtype=jnp.float32)
        b = jax.random.uniform(keys[2 * i + 1], (1, fan_out),
                               minval=-b_bound, maxval=b_bound, dtype=jnp.float32)
        params.extend([w, b])
    return tuple(params)


def actor_reference(s, params, a_lim):
    """Pure-JAX reference for correctness checking."""
    w1, b1, w2, b2, w3, b3, w4, b4 = params
    x = jnp.maximum(s @ w1 + b1, 0.0)
    x = jnp.maximum(x @ w2 + b2, 0.0)
    x = jnp.maximum(x @ w3 + b3, 0.0)
    return jnp.tanh(x @ w4 + b4) * a_lim


if __name__ == "__main__":
    key = jax.random.PRNGKey(0)
    k_param, k1, k2, k3 = jax.random.split(key, 4)

    s_dim, a_dim, a_lim = 8, 4, 2.0
    params = init_actor_params(k_param, s_dim, a_dim)

    # Small RL-inference batch (single 8-row tile path).
    s_small = jax.random.normal(k1, (2, s_dim), dtype=jnp.float32)
    out_small = jax.block_until_ready(actor_forward(s_small, params, a_lim))
    ref_small = actor_reference(s_small, params, a_lim)
    assert out_small.shape == (2, a_dim)
    assert jnp.allclose(out_small, ref_small, atol=1e-5, rtol=1e-5), \
        "small-batch mismatch vs reference"

    # Multi-tile batch: 3 grid steps, last tile partial (boundary-masked, 8-aligned).
    s_big = jax.random.normal(k2, (640, s_dim), dtype=jnp.float32)
    out_big = jax.block_until_ready(
        actor_forward(s_big, params, a_lim, tile_n=256))
    ref_big = actor_reference(s_big, params, a_lim)
    assert out_big.shape == (640, a_dim)
    assert jnp.allclose(out_big, ref_big, atol=1e-5, rtol=1e-5), \
        "tiled-batch mismatch vs reference"

    # Unaligned batch size: partial last tile with a non-multiple-of-8 tail.
    s_odd = jax.random.normal(k3, (330, s_dim), dtype=jnp.float32)
    out_odd = jax.block_until_ready(
        actor_forward(s_odd, params, a_lim, tile_n=256))
    ref_odd = actor_reference(s_odd, params, a_lim)
    assert out_odd.shape == (330, a_dim)
    assert jnp.allclose(out_odd, ref_odd, atol=1e-5, rtol=1e-5), \
        "unaligned-batch mismatch vs reference"

    # Pre-cast bf16 weights + bf16 output store, prep hoisted out of the call.
    prepared_bf16 = prepare_actor_params(params, use_bf16=True)
    out_bf16 = jax.block_until_ready(
        actor_forward(s_big, prepared_bf16, a_lim, tile_n=512, store_bf16=True))
    assert out_bf16.shape == (640, a_dim)
    assert jnp.allclose(out_bf16, ref_big, atol=5e-2, rtol=5e-2), \
        "bf16 path mismatch vs reference"

    print("KERNEL_OK")
</pallas_src>

<mosaic_0001>
module attributes {stable_mosaic.version = 11 : i64} {
  func.func @_actor_kernel(%arg0: i32, %arg1: memref<1x1xf32, #tpu.memory_space<smem>>, %arg2: memref<8x8xf32, #tpu.memory_space<vmem>>, %arg3: memref<8x256xf32, #tpu.memory_space<vmem>>, %arg4: memref<1x256xf32, #tpu.memory_space<vmem>>, %arg5: memref<256x128xf32, #tpu.memory_space<vmem>>, %arg6: memref<1x128xf32, #tpu.memory_space<vmem>>, %arg7: memref<128x128xf32, #tpu.memory_space<vmem>>, %arg8: memref<1x128xf32, #tpu.memory_space<vmem>>, %arg9: memref<128x128xf32, #tpu.memory_space<vmem>>, %arg10: memref<1x128xf32, #tpu.memory_space<vmem>>, %arg11: memref<8x128xf32, #tpu.memory_space<vmem>>) attributes {dimension_semantics = [#tpu.dimension_semantics<parallel>], iteration_bounds = array<i64: 1>, scalar_prefetch = 0 : i64, scratch_operands = 0 : i64, tpu.core_type = #tpu.core_type<tc>, window_params = [{transform_indices = @transform_0, window_bounds = array<i64: 1, 1>}, {transform_indices = @transform_1, window_bounds = array<i64: 8, 8>}, {pipeline_mode = #tpu.pipeline_mode<synchronous>, transform_indices = @transform_2, window_bounds = array<i64: 8, 256>}, {pipeline_mode = #tpu.pipeline_mode<synchronous>, transform_indices = @transform_3, window_bounds = array<i64: 1, 256>}, {pipeline_mode = #tpu.pipeline_mode<synchronous>, transform_indices = @transform_4, window_bounds = array<i64: 256, 128>}, {pipeline_mode = #tpu.pipeline_mode<synchronous>, transform_indices = @transform_5, window_bounds = array<i64: 1, 128>}, {pipeline_mode = #tpu.pipeline_mode<synchronous>, transform_indices = @transform_6, window_bounds = array<i64: 128, 128>}, {pipeline_mode = #tpu.pipeline_mode<synchronous>, transform_indices = @transform_7, window_bounds = array<i64: 1, 128>}, {pipeline_mode = #tpu.pipeline_mode<synchronous>, transform_indices = @transform_8, window_bounds = array<i64: 128, 128>}, {pipeline_mode = #tpu.pipeline_mode<synchronous>, transform_indices = @transform_9, window_bounds = array<i64: 1, 128>}, {transform_indices = @transform_10, window_bounds = array<i64: 8, 128>}]} {
    %c0 = arith.constant 0 : index
    %c0_0 = arith.constant 0 : index
    %0 = vector.load %arg2[%c0, %c0_0] : memref<8x8xf32, #tpu.memory_space<vmem>>, vector<8x8xf32>
    %c0_1 = arith.constant 0 : index
    %c0_2 = arith.constant 0 : index
    %1 = vector.load %arg3[%c0_1, %c0_2] : memref<8x256xf32, #tpu.memory_space<vmem>>, vector<8x256xf32>
    %cst = arith.constant dense<0.000000e+00> : vector<8x256xf32>
    %2 = tpu.matmul %0, %1, %cst {dimension_numbers = #tpu.dot_dimension_numbers<[1], [0], [0], [1], [0, 0, 1, 1], [], []>} : vector<8x8xf32>, vector<8x256xf32>, vector<8x256xf32> -> vector<8x256xf32>
    %c0_3 = arith.constant 0 : index
    %c0_4 = arith.constant 0 : index
    %3 = vector.load %arg4[%c0_3, %c0_4] : memref<1x256xf32, #tpu.memory_space<vmem>>, vector<1x256xf32>
    %4 = vector.broadcast %3 : vector<1x256xf32> to vector<8x256xf32>
    %5 = arith.addf %2, %4 : vector<8x256xf32>
    %cst_5 = arith.constant 0.000000e+00 : f32
    %6 = vector.broadcast %cst_5 : f32 to vector<8x256xf32>
    %7 = arith.maximumf %5, %6 : vector<8x256xf32>
    %c0_6 = arith.constant 0 : index
    %c0_7 = arith.constant 0 : index
    %8 = vector.load %arg5[%c0_6, %c0_7] : memref<256x128xf32, #tpu.memory_space<vmem>>, vector<256x128xf32>
    %cst_8 = arith.constant dense<0.000000e+00> : vector<8x128xf32>
    %9 = tpu.matmul %7, %8, %cst_8 {dimension_numbers = #tpu.dot_dimension_numbers<[1], [0], [0], [1], [0, 0, 1, 1], [], []>} : vector<8x256xf32>, vector<256x128xf32>, vector<8x128xf32> -> vector<8x128xf32>
    %c0_9 = arith.constant 0 : index
    %c0_10 = arith.constant 0 : index
    %10 = vector.load %arg6[%c0_9, %c0_10] : memref<1x128xf32, #tpu.memory_space<vmem>>, vector<1x128xf32>
    %11 = vector.broadcast %10 : vector<1x128xf32> to vector<8x128xf32>
    %12 = arith.addf %9, %11 : vector<8x128xf32>
    %cst_11 = arith.constant 0.000000e+00 : f32
    %13 = vector.broadcast %cst_11 : f32 to vector<8x128xf32>
    %14 = arith.maximumf %12, %13 : vector<8x128xf32>
    %c0_12 = arith.constant 0 : index
    %c0_13 = arith.constant 0 : index
    %15 = vector.load %arg7[%c0_12, %c0_13] : memref<128x128xf32, #tpu.memory_space<vmem>>, vector<128x128xf32>
    %cst_14 = arith.constant dense<0.000000e+00> : vector<8x128xf32>
    %16 = tpu.matmul %14, %15, %cst_14 {dimension_numbers = #tpu.dot_dimension_numbers<[1], [0], [0], [1], [0, 0, 1, 1], [], []>} : vector<8x128xf32>, vector<128x128xf32>, vector<8x128xf32> -> vector<8x128xf32>
    %c0_15 = arith.constant 0 : index
    %c0_16 = arith.constant 0 : index
    %17 = vector.load %arg8[%c0_15, %c0_16] : memref<1x128xf32, #tpu.memory_space<vmem>>, vector<1x128xf32>
    %18 = vector.broadcast %17 : vector<1x128xf32> to vector<8x128xf32>
    %19 = arith.addf %16, %18 : vector<8x128xf32>
    %cst_17 = arith.constant 0.000000e+00 : f32
    %20 = vector.broadcast %cst_17 : f32 to vector<8x128xf32>
    %21 = arith.maximumf %19, %20 : vector<8x128xf32>
    %c0_18 = arith.constant 0 : index
    %c0_19 = arith.constant 0 : index
    %22 = vector.load %arg9[%c0_18, %c0_19] : memref<128x128xf32, #tpu.memory_space<vmem>>, vector<128x128xf32>
    %cst_20 = arith.constant dense<0.000000e+00> : vector<8x128xf32>
    %23 = tpu.matmul %21, %22, %cst_20 {dimension_numbers = #tpu.dot_dimension_numbers<[1], [0], [0], [1], [0, 0, 1, 1], [], []>} : vector<8x128xf32>, vector<128x128xf32>, vector<8x128xf32> -> vector<8x128xf32>
    %c0_21 = arith.constant 0 : index
    %c0_22 = arith.constant 0 : index
    %24 = vector.load %arg10[%c0_21, %c0_22] : memref<1x128xf32, #tpu.memory_space<vmem>>, vector<1x128xf32>
    %25 = vector.broadcast %24 : vector<1x128xf32> to vector<8x128xf32>
    %26 = arith.addf %23, %25 : vector<8x128xf32>
    %27 = math.tanh %26 : vector<8x128xf32>
    %c0_23 = arith.constant 0 : index
    %c0_24 = arith.constant 0 : index
    %28 = memref.load %arg1[%c0_23, %c0_24] : memref<1x1xf32, #tpu.memory_space<smem>>
    %29 = vector.broadcast %28 : f32 to vector<8x128xf32>
    %30 = arith.mulf %27, %29 : vector<8x128xf32>
    %c0_25 = arith.constant 0 : index
    %c0_26 = arith.constant 0 : index
    %31 = vector.load %arg11[%c0_25, %c0_26] : memref<8x128xf32, #tpu.memory_space<vmem>>, vector<8x128xf32>
    tpu.vector_store %arg11[%c0_25, %c0_26], %30 {strides = array<i32>} : memref<8x128xf32, #tpu.memory_space<vmem>>, vector<8x128xf32>,
    return
  }
  func.func @transform_0(%arg0: i32) -> (i32, i32) {
    %c0_i32 = arith.constant 0 : i32
    %c0_i32_0 = arith.constant 0 : i32
    %c0_i32_1 = arith.constant 0 : i32
    return %c0_i32, %c0_i32_0 : i32, i32
  }
  func.func @transform_1(%arg0: i32) -> (i32, i32) {
    %c0_i32 = arith.constant 0 : i32
    %c0_i32_0 = arith.constant 0 : i32
    return %arg0, %c0_i32 : i32, i32
  }
  func.func @transform_2(%arg0: i32) -> (i32, i32) {
    %c0_i32 = arith.constant 0 : i32
    %c0_i32_0 = arith.constant 0 : i32
    %c0_i32_1 = arith.constant 0 : i32
    return %c0_i32, %c0_i32_0 : i32, i32
  }
  func.func @transform_3(%arg0: i32) -> (i32, i32) {
    %c0_i32 = arith.constant 0 : i32
    %c0_i32_0 = arith.constant 0 : i32
    %c0_i32_1 = arith.constant 0 : i32
    return %c0_i32, %c0_i32_0 : i32, i32
  }
  func.func @transform_4(%arg0: i32) -> (i32, i32) {
    %c0_i32 = arith.constant 0 : i32
    %c0_i32_0 = arith.constant 0 : i32
    %c0_i32_1 = arith.constant 0 : i32
    return %c0_i32, %c0_i32_0 : i32, i32
  }
  func.func @transform_5(%arg0: i32) -> (i32, i32) {
    %c0_i32 = arith.constant 0 : i32
    %c0_i32_0 = arith.constant 0 : i32
    %c0_i32_1 = arith.constant 0 : i32
    return %c0_i32, %c0_i32_0 : i32, i32
  }
  func.func @transform_6(%arg0: i32) -> (i32, i32) {
    %c0_i32 = arith.constant 0 : i32
    %c0_i32_0 = arith.constant 0 : i32
    %c0_i32_1 = arith.constant 0 : i32
    return %c0_i32, %c0_i32_0 : i32, i32
  }
  func.func @transform_7(%arg0: i32) -> (i32, i32) {
    %c0_i32 = arith.constant 0 : i32
    %c0_i32_0 = arith.constant 0 : i32
    %c0_i32_1 = arith.constant 0 : i32
    return %c0_i32, %c0_i32_0 : i32, i32
  }
  func.func @transform_8(%arg0: i32) -> (i32, i32) {
    %c0_i32 = arith.constant 0 : i32
    %c0_i32_0 = arith.constant 0 : i32
    %c0_i32_1 = arith.constant 0 : i32
    return %c0_i32, %c0_i32_0 : i32, i32
  }
  func.func @transform_9(%arg0: i32) -> (i32, i32) {
    %c0_i32 = arith.constant 0 : i32
    %c0_i32_0 = arith.constant 0 : i32
    %c0_i32_1 = arith.constant 0 : i32
    return %c0_i32, %c0_i32_0 : i32, i32
  }
  func.func @transform_10(%arg0: i32) -> (i32, i32) {
    %c0_i32 = arith.constant 0 : i32
    %c0_i32_0 = arith.constant 0 : i32
    return %arg0, %c0_i32 : i32, i32
  }
}

</mosaic_0001>

<llo_original>
// kernel: tpu_custom_call.1
$region0: #{tpu_custom_call.1}
  #allocation0 [shape = 'u32[]', space=smem, size = 0x4, offset = 0x4, fixed_abs, tag = 'smem constant byte address 0x4 - core index']
  #allocation1 [shape = 'u32[144,128]{1,0:T(1,128)}', space=vmem, size = 0x12000, scoped, tag = 'internal scratch']
  #allocation2 [shape = 'f32[1,1]{1,0:T(1,128)S(6)}', space=smem, size = 0x200, scoped, tag = 'scoped memory for tpu_custom_call.1']
  %s0 = inlined_call_operand.<no memory space> [shape: f32[1,1], index: 0, kind: input, shape index: {}]
  %s1 = inlined_call_operand.hbm [shape: f32[8,8], index: 1, kind: input, shape index: {}]
  %s2 = inlined_call_operand.hbm [shape: f32[8,256], index: 2, kind: input, shape index: {}]
  %s3 = inlined_call_operand.vmem [shape: f32[1,256], index: 3, kind: input, shape index: {}]
  %s4 = inlined_call_operand.hbm [shape: f32[256,128], index: 4, kind: input, shape index: {}]
  %s5 = inlined_call_operand.vmem [shape: f32[1,128], index: 5, kind: input, shape index: {}]
  %s6 = inlined_call_operand.hbm [shape: f32[128,128], index: 6, kind: input, shape index: {}]
  %s7 = inlined_call_operand.vmem [shape: f32[1,128], index: 7, kind: input, shape index: {}]
  %s8 = inlined_call_operand.hbm [shape: f32[128,128], index: 8, kind: input, shape index: {}]
  %s9 = inlined_call_operand.vmem [shape: f32[1,128], index: 9, kind: input, shape index: {}]
  %s10 = inlined_call_operand.hbm [shape: f32[8,128], index: 10, kind: output, shape index: {}]
  %s11 = sld [smem:[#allocation0]]
  $region70: #{tpu_custom_call.1} parent=0
    _
  %s13 = ssub.s32 1, %s11
  %s14 = scalar_select 0, %s13, %s11
  %15 = sst [smem:[#allocation2]] %s0
  $region1: #{tpu_custom_call.1} parent=0
    #allocation3 [shape = 'u8[4096]{0}', space=vmem, size = 0x1000, scoped, tag = 'input window, operand 1, single buffered']
    #allocation4 [shape = 's32[1]{0}', space=sflag, size = 0x4, scoped, tag = 'scoped memory for tpu_custom_call.1']
    #allocation5 [shape = 's32[1]{0}', space=sflag, size = 0x4, scoped, tag = 'scoped memory for tpu_custom_call.1']
    #allocation6 [shape = 'u8[8192]{0}', space=vmem, size = 0x2000, scoped, tag = 'input window, operand 2, single buffered']
    #allocation7 [shape = 's32[1]{0}', space=sflag, size = 0x4, scoped, tag = 'scoped memory for tpu_custom_call.1']
    #allocation8 [shape = 'u8[131072]{0}', space=vmem, size = 0x20000, scoped, tag = 'input window, operand 4, single buffered']
    #allocation9 [shape = 'u8[65536]{0}', space=vmem, size = 0x10000, scoped, tag = 'input window, operand 6, single buffered']
    #allocation10 [shape = 's32[1]{0}', space=sflag, size = 0x4, scoped, tag = 'scoped memory for tpu_custom_call.1']
    #allocation11 [shape = 'u8[65536]{0}', space=vmem, size = 0x10000, scoped, tag = 'input window, operand 8, single buffered']
    #allocation12 [shape = 'u8[4096]{0}', space=vmem, size = 0x1000, scoped, tag = 'output window, operand 0, single buffered']
    %16 = vsyncpa [#allocation4], 0
    %17 = vsyncpa [#allocation7], 0
    %18 = vsyncpa [#allocation10], 0
    %19 = vsyncpa [#allocation5], 0
    // Predicated region
    $region2: #{tpu_custom_call.1} parent=1 // pred_check
      _
    $region3: #{tpu_custom_call.1} parent=1 // pred_check_branch
      %21 = sbr.rel (0) target = $region5
    $region4: #{tpu_custom_call.1} parent=1 // pred_region
      _
    $region5: #{tpu_custom_call.1} parent=1 // pred_fallthru
      _
    // Predicated region
    $region6: #{tpu_custom_call.1} parent=1 // pred_check
      _
    $region7: #{tpu_custom_call.1} parent=1 // pred_check_branch
      %23 = sbr.rel (0) target = $region9
    $region8: #{tpu_custom_call.1} parent=1 // pred_region
      %s25 = ssub.s32 128, 128
      %26 = vsyncadd [#allocation4], %s25
      %s28 = sshll.u32 [#allocation3], 4
      %s29 = int_to_ptr.vmem [resolvable:$true] %s28
      %31 = dma.hbm_to_vmem [thread:$0]  %s1, 128, %s29, [#allocation4]
    $region9: #{tpu_custom_call.1} parent=1 // pred_fallthru
      _
    // Predicated region
    $region10: #{tpu_custom_call.1} parent=1 // pred_check
      _
    $region11: #{tpu_custom_call.1} parent=1 // pred_check_branch
      %33 = sbr.rel (0) target = $region13
    $region12: #{tpu_custom_call.1} parent=1 // pred_region
      %s35 = ssub.s32 256, 256
      %36 = vsyncadd [#allocation7], %s35
      %s38 = sshll.u32 [#allocation6], 4
      %s39 = int_to_ptr.vmem [resolvable:$true] %s38
      %41 = dma.hbm_to_vmem [thread:$0]  %s2, 256, %s39, [#allocation7]
    $region13: #{tpu_custom_call.1} parent=1 // pred_fallthru
      _
    // Predicated region
    $region14: #{tpu_custom_call.1} parent=1 // pred_check
      _
    $region15: #{tpu_custom_call.1} parent=1 // pred_check_branch
      %43 = sbr.rel (0) target = $region17
    $region16: #{tpu_custom_call.1} parent=1 // pred_region
      _
    $region17: #{tpu_custom_call.1} parent=1 // pred_fallthru
      _
    // Predicated region
    $region18: #{tpu_custom_call.1} parent=1 // pred_check
      _
    $region19: #{tpu_custom_call.1} parent=1 // pred_check_branch
      %45 = sbr.rel (0) target = $region21
    $region20: #{tpu_custom_call.1} parent=1 // pred_region
      %s47 = ssub.s32 4096, 4096
      %48 = vsyncadd [#allocation7], %s47
      %s49 = sshll.u32 [#allocation8], 4
      %s50 = int_to_ptr.vmem [resolvable:$true] %s49
      %55 = dma.hbm_to_vmem [thread:$0]  %s4, 4096, %s50, [#allocation7], 128, 128, 8
    $region21: #{tpu_custom_call.1} parent=1 // pred_fallthru
      _
    // Predicated region
    $region22: #{tpu_custom_call.1} parent=1 // pred_check
      _
    $region23: #{tpu_custom_call.1} parent=1 // pred_check_branch
      %57 = sbr.rel (0) target = $region25
    $region24: #{tpu_custom_call.1} parent=1 // pred_region
      _
    $region25: #{tpu_custom_call.1} parent=1 // pred_fallthru
      _
    // Predicated region
    $region26: #{tpu_custom_call.1} parent=1 // pred_check
      _
    $region27: #{tpu_custom_call.1} parent=1 // pred_check_branch
      %59 = sbr.rel (0) target = $region29
    $region28: #{tpu_custom_call.1} parent=1 // pred_region
      %s61 = ssub.s32 2048, 2048
      %62 = vsyncadd [#allocation10], %s61
      %s63 = sshll.u32 [#allocation9], 4
      %s64 = int_to_ptr.vmem [resolvable:$true] %s63
      %69 = dma.hbm_to_vmem [thread:$0]  %s6, 2048, %s64, [#allocation10], 128, 128, 8
    $region29: #{tpu_custom_call.1} parent=1 // pred_fallthru
      _
    // Predicated region
    $region30: #{tpu_custom_call.1} parent=1 // pred_check
      _
    $region31: #{tpu_custom_call.1} parent=1 // pred_check_branch
      %71 = sbr.rel (0) target = $region33
    $region32: #{tpu_custom_call.1} parent=1 // pred_region
      _
    $region33: #{tpu_custom_call.1} parent=1 // pred_fallthru
      _
    // Predicated region
    $region34: #{tpu_custom_call.1} parent=1 // pred_check
      _
    $region35: #{tpu_custom_call.1} parent=1 // pred_check_branch
      %73 = sbr.rel (0) target = $region37
    $region36: #{tpu_custom_call.1} parent=1 // pred_region
      %s75 = ssub.s32 2048, 2048
      %76 = vsyncadd [#allocation10], %s75
      %s77 = sshll.u32 [#allocation11], 4
      %s78 = int_to_ptr.vmem [resolvable:$true] %s77
      %83 = dma.hbm_to_vmem [thread:$0]  %s8, 2048, %s78, [#allocation10], 128, 128, 8
    $region37: #{tpu_custom_call.1} parent=1 // pred_fallthru
      _
    // Predicated region
    $region38: #{tpu_custom_call.1} parent=1 // pred_check
      _
    $region39: #{tpu_custom_call.1} parent=1 // pred_check_branch
      %85 = sbr.rel (0) target = $region41
    $region40: #{tpu_custom_call.1} parent=1 // pred_region
      _
    $region41: #{tpu_custom_call.1} parent=1 // pred_fallthru
      _
    // Predicated region
    $region42: #{tpu_custom_call.1} parent=1 // pred_check
      _
    $region43: #{tpu_custom_call.1} parent=1 // pred_check_branch
      %87 = sbr.rel (0) target = $region45
    $region44: #{tpu_custom_call.1} parent=1 // pred_region
      %88 = dma.done [#allocation4], 128
    $region45: #{tpu_custom_call.1} parent=1 // pred_fallthru
      _
    // Predicated region
    $region46: #{tpu_custom_call.1} parent=1 // pred_check
      _
    $region47: #{tpu_custom_call.1} parent=1 // pred_check_branch
      %90 = sbr.rel (0) target = $region49
    $region48: #{tpu_custom_call.1} parent=1 // pred_region
      %91 = dma.done [#allocation7], 256
    $region49: #{tpu_custom_call.1} parent=1 // pred_fallthru
      _
    // Predicated region
    $region50: #{tpu_custom_call.1} parent=1 // pred_check
      _
    $region51: #{tpu_custom_call.1} parent=1 // pred_check_branch
      %93 = sbr.rel (0) target = $region53
    $region52: #{tpu_custom_call.1} parent=1 // pred_region
      %94 = dma.done [#allocation7], 4096
    $region53: #{tpu_custom_call.1} parent=1 // pred_fallthru
      _
    // Predicated region
    $region54: #{tpu_custom_call.1} parent=1 // pred_check
      _
    $region55: #{tpu_custom_call.1} parent=1 // pred_check_branch
      %96 = sbr.rel (0) target = $region57
    $region56: #{tpu_custom_call.1} parent=1 // pred_region
      %97 = dma.done [#allocation10], 2048
    $region57: #{tpu_custom_call.1} parent=1 // pred_fallthru
      _
    // Predicated region
    $region58: #{tpu_custom_call.1} parent=1 // pred_check
      _
    $region59: #{tpu_custom_call.1} parent=1 // pred_check_branch
      %99 = sbr.rel (0) target = $region61
    $region60: #{tpu_custom_call.1} parent=1 // pred_region
      %100 = dma.done [#allocation10], 2048
    $region61: #{tpu_custom_call.1} parent=1 // pred_fallthru
      _
    %v101 = vld [vmem:[#allocation3] sm:$0xff]
    %v102 = vld [vmem:[#allocation6] sm:$0xff]
    %v103 = vld [vmem:[#allocation6 + $0x8] sm:$0xff]
    %v104 = vld [vmem:[%s3] sm:$0x3]
    %v106 = vlaneseq
    %v107 = vshrl.u32 %v106, 7
    %v108 = vsub.s32 0, %v107
    %v109 = vrot.slane %v104, %v108
    %v110 = vlaneseq
    %v111 = vshrl.u32 %v110, 7
    %v112 = vsub.s32 1, %v111
    %v113 = vrot.slane %v104, %v112
    %vm116 = vcmask 64512
    %v118 = vsel %vm116, %v101, 0
    %120 = vmatprep.subr.mxu0 %v103
    %121 = vmatpush1.msra.mxu0 %v102
    %122 = vmatprep.subr.mxu0 0.0
    %123 = vmatpush1.msra.mxu0 0.0
    %124 = vmatprep.subr.mxu0 0.0
    %125 = vmatpush1.msra.mxu0 0.0
    %126 = vmatprep.subr.mxu0 0.0
    %127 = vmatpush1.msra.mxu0 0.0
    %128 = vmatprep.subr.mxu0 0.0
    %129 = vmatpush1.msra.mxu0 0.0
    %130 = vmatprep.subr.mxu0 0.0
    %131 = vmatpush1.msra.mxu0 0.0
    %132 = vmatprep.subr.mxu0 0.0
    %133 = vmatpush1.msra.mxu0 0.0
    %134 = vmatprep.subr.mxu0 0.0
    %135 = vmatpush1.msra.mxu0 0.0
    %136 = vmatprep.subr.mxu0 0.0
    %137 = vmatpush1.msra.mxu0 0.0
    %138 = vmatprep.subr.mxu0 0.0
    %139 = vmatpush1.msra.mxu0 0.0
    %140 = vmatprep.subr.mxu0 0.0
    %141 = vmatpush1.msra.mxu0 0.0
    %142 = vmatprep.subr.mxu0 0.0
    %143 = vmatpush1.msra.mxu0 0.0
    %144 = vmatprep.subr.mxu0 0.0
    %145 = vmatpush1.msra.mxu0 0.0
    %146 = vmatprep.subr.mxu0 0.0
    %147 = vmatpush1.msra.mxu0 0.0
    %148 = vmatprep.subr.mxu0 0.0
    %149 = vmatpush1.msra.mxu0 0.0
    %150 = vmatprep.subr.mxu0 0.0
    %151 = vmatpush1.msra.mxu0 0.0
    %152 = vmatprep.subr.mxu0 0.0
    %153 = vmatpush1.msra.mxu0 0.0
    %154 = vmatprep.subr.mxu0 0.0
    %155 = vmatpush1.msra.mxu0 0.0
    %156 = vmatprep.subr.mxu0 0.0
    %157 = vmatpush1.msra.mxu0 0.0
    %158 = vmatprep.subr.mxu0 0.0
    %159 = vmatpush1.msra.mxu0 0.0
    %160 = vmatprep.subr.mxu0 0.0
    %161 = vmatpush1.msra.mxu0 0.0
    %162 = vmatprep.subr.mxu0 0.0
    %163 = vmatpush1.msra.mxu0 0.0
    %164 = vmatprep.subr.mxu0 0.0
    %165 = vmatpush1.msra.mxu0 0.0
    %166 = vmatprep.subr.mxu0 0.0
    %167 = vmatpush1.msra.mxu0 0.0
    %168 = vmatprep.subr.mxu0 0.0
    %169 = vmatpush1.msra.mxu0 0.0
    %170 = vmatprep.subr.mxu0 0.0
    %171 = vmatpush1.msra.mxu0 0.0
    %172 = vmatprep.subr.mxu0 0.0
    %173 = vmatpush1.msra.mxu0 0.0
    %174 = vmatprep.subr.mxu0 0.0
    %175 = vmatpush1.msra.mxu0 0.0
    %176 = vmatprep.subr.mxu0 0.0
    %177 = vmatpush1.msra.mxu0 0.0
    %178 = vmatprep.subr.mxu0 0.0
    %179 = vmatpush1.msra.mxu0 0.0
    %180 = vmatprep.subr.mxu0 0.0
    %181 = vmatpush1.msra.mxu0 0.0
    %182 = vmatprep.subr.mxu0 0.0
    %183 = vmatpush1.msra.mxu0 0.0
    %184 = vmatprep.mubr.f32.mxu0 0.0
    %185 = vmatmul.mubr.f32.gmra.mrb[0].mxu0 %v118
    %v186 = vpop.f32.mrb[0].mxu0
    %v187 = vadd.f32 %v109, %v186
    %v188 = vpop.f32.mrb[0].mxu0
    %v189 = vadd.f32 %v113, %v188
    %190 = vdwg.mxu0
    %v191 = vmax.f32 %v187, 0.0
    %v192 = vmax.f32 %v189, 0.0
    %v193 = vld [vmem:[#allocation8] sm:$0xff]
    %v194 = vld [vmem:[#allocation8 + $0x8] sm:$0xff]
    %v195 = vld [vmem:[#allocation8 + $0x10] sm:$0xff]
    %v196 = vld [vmem:[#allocation8 + $0x18] sm:$0xff]
    %v197 = vld [vmem:[#allocation8 + $0x20] sm:$0xff]
    %v198 = vld [vmem:[#allocation8 + $0x28] sm:$0xff]
    %v199 = vld [vmem:[#allocation8 + $0x30] sm:$0xff]
    %v200 = vld [vmem:[#allocation8 + $0x38] sm:$0xff]
    %v201 = vld [vmem:[#allocation8 + $0x40] sm:$0xff]
    %v202 = vld [vmem:[#allocation8 + $0x48] sm:$0xff]
    %v203 = vld [vmem:[#allocation8 + $0x50] sm:$0xff]
    %v204 = vld [vmem:[#allocation8 + $0x58] sm:$0xff]
    %v205 = vld [vmem:[#allocation8 + $0x60] sm:$0xff]
    %v206 = vld [vmem:[#allocation8 + $0x68] sm:$0xff]
    %v207 = vld [vmem:[#allocation8 + $0x70] sm:$0xff]
    %v208 = vld [vmem:[#allocation8 + $0x78] sm:$0xff]
    %v209 = vld [vmem:[#allocation8 + $0x80] sm:$0xff]
    %v210 = vld [vmem:[#allocation8 + $0x88] sm:$0xff]
    %v211 = vld [vmem:[#allocation8 + $0x90] sm:$0xff]
    %v212 = vld [vmem:[#allocation8 + $0x98] sm:$0xff]
    %v213 = vld [vmem:[#allocation8 + $0xa0] sm:$0xff]
    %v214 = vld [vmem:[#allocation8 + $0xa8] sm:$0xff]
    %v215 = vld [vmem:[#allocation8 + $0xb0] sm:$0xff]
    %v216 = vld [vmem:[#allocation8 + $0xb8] sm:$0xff]
    %v217 = vld [vmem:[#allocation8 + $0xc0] sm:$0xff]
    %v218 = vld [vmem:[#allocation8 + $0xc8] sm:$0xff]
    %v219 = vld [vmem:[#allocation8 + $0xd0] sm:$0xff]
    %v220 = vld [vmem:[#allocation8 + $0xd8] sm:$0xff]
    %v221 = vld [vmem:[#allocation8 + $0xe0] sm:$0xff]
    %v222 = vld [vmem:[#allocation8 + $0xe8] sm:$0xff]
    %v223 = vld [vmem:[#allocation8 + $0xf0] sm:$0xff]
    %v224 = vld [vmem:[#allocation8 + $0xf8] sm:$0xff]
    %v225 = vld [vmem:[%s5] sm:$0x1]
    %v227 = vlaneseq
    %v228 = vshrl.u32 %v227, 7
    %v229 = vsub.s32 0, %v228
    %v230 = vrot.slane %v225, %v229
    %232 = vmatprep.subr.mxu0 0.0
    %233 = vmatpush1.msra.mxu0 %v193
    %234 = vmatprep.subr.mxu0 0.0
    %235 = vmatpush1.msra.mxu0 %v194
    %236 = vmatprep.subr.mxu0 0.0
    %237 = vmatpush1.msra.mxu0 %v195
    %238 = vmatprep.subr.mxu0 0.0
    %239 = vmatpush1.msra.mxu0 %v196
    %240 = vmatprep.subr.mxu0 0.0
    %241 = vmatpush1.msra.mxu0 %v197
    %242 = vmatprep.subr.mxu0 0.0
    %243 = vmatpush1.msra.mxu0 %v198
    %244 = vmatprep.subr.mxu0 0.0
    %245 = vmatpush1.msra.mxu0 %v199
    %246 = vmatprep.subr.mxu0 0.0
    %247 = vmatpush1.msra.mxu0 %v200
    %248 = vmatprep.subr.mxu0 0.0
    %249 = vmatpush1.msra.mxu0 %v201
    %250 = vmatprep.subr.mxu0 0.0
    %251 = vmatpush1.msra.mxu0 %v202
    %252 = vmatprep.subr.mxu0 0.0
    %253 = vmatpush1.msra.mxu0 %v203
    %254 = vmatprep.subr.mxu0 0.0
    %255 = vmatpush1.msra.mxu0 %v204
    %256 = vmatprep.subr.mxu0 0.0
    %257 = vmatpush1.msra.mxu0 %v205
    %258 = vmatprep.subr.mxu0 0.0
    %259 = vmatpush1.msra.mxu0 %v206
    %260 = vmatprep.subr.mxu0 0.0
    %261 = vmatpush1.msra.mxu0 %v207
    %262 = vmatprep.subr.mxu0 0.0
    %263 = vmatpush1.msra.mxu0 %v208
    %264 = vmatprep.subr.mxu0 0.0
    %265 = vmatpush1.msra.mxu0 %v209
    %266 = vmatprep.subr.mxu0 0.0
    %267 = vmatpush1.msra.mxu0 %v210
    %268 = vmatprep.subr.mxu0 0.0
    %269 = vmatpush1.msra.mxu0 %v211
    %270 = vmatprep.subr.mxu0 0.0
    %271 = vmatpush1.msra.mxu0 %v212
    %272 = vmatprep.subr.mxu0 0.0
    %273 = vmatpush1.msra.mxu0 %v213
    %274 = vmatprep.subr.mxu0 0.0
    %275 = vmatpush1.msra.mxu0 %v214
    %276 = vmatprep.subr.mxu0 0.0
    %277 = vmatpush1.msra.mxu0 %v215
    %278 = vmatprep.subr.mxu0 0.0
    %279 = vmatpush1.msra.mxu0 %v216
    %280 = vmatprep.subr.mxu0 0.0
    %281 = vmatpush1.msra.mxu0 %v217
    %282 = vmatprep.subr.mxu0 0.0
    %283 = vmatpush1.msra.mxu0 %v218
    %284 = vmatprep.subr.mxu0 0.0
    %285 = vmatpush1.msra.mxu0 %v219
    %286 = vmatprep.subr.mxu0 0.0
    %287 = vmatpush1.msra.mxu0 %v220
    %288 = vmatprep.subr.mxu0 0.0
    %289 = vmatpush1.msra.mxu0 %v221
    %290 = vmatprep.subr.mxu0 0.0
    %291 = vmatpush1.msra.mxu0 %v222
    %292 = vmatprep.subr.mxu0 0.0
    %293 = vmatpush1.msra.mxu0 %v223
    %294 = vmatprep.subr.mxu0 0.0
    %295 = vmatpush1.msra.mxu0 %v224
    %296 = vmatprep.mubr.f32.mxu0 %v192
    %297 = vmatmul.mubr.f32.gmra.mrb[0].mxu0 %v191
    %v298 = vpop.f32.mrb[0].mxu0
    %v299 = vadd.f32 %v230, %v298
    %v300 = vpop.f32.mrb[0].mxu0
    %301 = vdwg.mxu0
    %v302 = vmax.f32 %v299, 0.0
    %v303 = vld [vmem:[#allocation9] sm:$0xff]
    %v304 = vld [vmem:[#allocation9 + $0x8] sm:$0xff]
    %v305 = vld [vmem:[#allocation9 + $0x10] sm:$0xff]
    %v306 = vld [vmem:[#allocation9 + $0x18] sm:$0xff]
    %v307 = vld [vmem:[#allocation9 + $0x20] sm:$0xff]
    %v308 = vld [vmem:[#allocation9 + $0x28] sm:$0xff]
    %v309 = vld [vmem:[#allocation9 + $0x30] sm:$0xff]
    %v310 = vld [vmem:[#allocation9 + $0x38] sm:$0xff]
    %v311 = vld [vmem:[#allocation9 + $0x40] sm:$0xff]
    %v312 = vld [vmem:[#allocation9 + $0x48] sm:$0xff]
    %v313 = vld [vmem:[#allocation9 + $0x50] sm:$0xff]
    %v314 = vld [vmem:[#allocation9 + $0x58] sm:$0xff]
    %v315 = vld [vmem:[#allocation9 + $0x60] sm:$0xff]
    %v316 = vld [vmem:[#allocation9 + $0x68] sm:$0xff]
    %v317 = vld [vmem:[#allocation9 + $0x70] sm:$0xff]
    %v318 = vld [vmem:[#allocation9 + $0x78] sm:$0xff]
    %v319 = vld [vmem:[%s7] sm:$0x1]
    %v321 = vlaneseq
    %v322 = vshrl.u32 %v321, 7
    %v323 = vsub.s32 0, %v322
    %v324 = vrot.slane %v319, %v323
    %326 = vmatprep.subr.mxu0 0.0
    %327 = vmatpush1.msra.mxu0 %v303
    %328 = vmatprep.subr.mxu0 0.0
    %329 = vmatpush1.msra.mxu0 %v304
    %330 = vmatprep.subr.mxu0 0.0
    %331 = vmatpush1.msra.mxu0 %v305
    %332 = vmatprep.subr.mxu0 0.0
    %333 = vmatpush1.msra.mxu0 %v306
    %334 = vmatprep.subr.mxu0 0.0
    %335 = vmatpush1.msra.mxu0 %v307
    %336 = vmatprep.subr.mxu0 0.0
    %337 = vmatpush1.msra.mxu0 %v308
    %338 = vmatprep.subr.mxu0 0.0
    %339 = vmatpush1.msra.mxu0 %v309
    %340 = vmatprep.subr.mxu0 0.0
    %341 = vmatpush1.msra.mxu0 %v310
    %342 = vmatprep.subr.mxu0 0.0
    %343 = vmatpush1.msra.mxu0 %v311
    %344 = vmatprep.subr.mxu0 0.0
    %345 = vmatpush1.msra.mxu0 %v312
    %346 = vmatprep.subr.mxu0 0.0
    %347 = vmatpush1.msra.mxu0 %v313
    %348 = vmatprep.subr.mxu0 0.0
    %349 = vmatpush1.msra.mxu0 %v314
    %350 = vmatprep.subr.mxu0 0.0
    %351 = vmatpush1.msra.mxu0 %v315
    %352 = vmatprep.subr.mxu0 0.0
    %353 = vmatpush1.msra.mxu0 %v316
    %354 = vmatprep.subr.mxu0 0.0
    %355 = vmatpush1.msra.mxu0 %v317
    %356 = vmatprep.subr.mxu0 0.0
    %357 = vmatpush1.msra.mxu0 %v318
    %358 = vmatprep.subr.mxu0 0.0
    %359 = vmatpush1.msra.mxu0 0.0
    %360 = vmatprep.subr.mxu0 0.0
    %361 = vmatpush1.msra.mxu0 0.0
    %362 = vmatprep.subr.mxu0 0.0
    %363 = vmatpush1.msra.mxu0 0.0
    %364 = vmatprep.subr.mxu0 0.0
    %365 = vmatpush1.msra.mxu0 0.0
    %366 = vmatprep.subr.mxu0 0.0
    %367 = vmatpush1.msra.mxu0 0.0
    %368 = vmatprep.subr.mxu0 0.0
    %369 = vmatpush1.msra.mxu0 0.0
    %370 = vmatprep.subr.mxu0 0.0
    %371 = vmatpush1.msra.mxu0 0.0
    %372 = vmatprep.subr.mxu0 0.0
    %373 = vmatpush1.msra.mxu0 0.0
    %374 = vmatprep.subr.mxu0 0.0
    %375 = vmatpush1.msra.mxu0 0.0
    %376 = vmatprep.subr.mxu0 0.0
    %377 = vmatpush1.msra.mxu0 0.0
    %378 = vmatprep.subr.mxu0 0.0
    %379 = vmatpush1.msra.mxu0 0.0
    %380 = vmatprep.subr.mxu0 0.0
    %381 = vmatpush1.msra.mxu0 0.0
    %382 = vmatprep.subr.mxu0 0.0
    %383 = vmatpush1.msra.mxu0 0.0
    %384 = vmatprep.subr.mxu0 0.0
    %385 = vmatpush1.msra.mxu0 0.0
    %386 = vmatprep.subr.mxu0 0.0
    %387 = vmatpush1.msra.mxu0 0.0
    %388 = vmatprep.subr.mxu0 0.0
    %389 = vmatpush1.msra.mxu0 0.0
    %390 = vmatprep.mubr.f32.mxu0 0.0
    %391 = vmatmul.mubr.f32.gmra.mrb[0].mxu0 %v302
    %v392 = vpop.f32.mrb[0].mxu0
    %v393 = vadd.f32 %v324, %v392
    %v394 = vpop.f32.mrb[0].mxu0
    %395 = vdwg.mxu0
    %v396 = vmax.f32 %v393, 0.0
    %v397 = vld [vmem:[#allocation11] sm:$0xff]
    %v398 = vld [vmem:[#allocation11 + $0x8] sm:$0xff]
    %v399 = vld [vmem:[#allocation11 + $0x10] sm:$0xff]
    %v400 = vld [vmem:[#allocation11 + $0x18] sm:$0xff]
    %v401 = vld [vmem:[#allocation11 + $0x20] sm:$0xff]
    %v402 = vld [vmem:[#allocation11 + $0x28] sm:$0xff]
    %v403 = vld [vmem:[#allocation11 + $0x30] sm:$0xff]
    %v404 = vld [vmem:[#allocation11 + $0x38] sm:$0xff]
    %v405 = vld [vmem:[#allocation11 + $0x40] sm:$0xff]
    %v406 = vld [vmem:[#allocation11 + $0x48] sm:$0xff]
    %v407 = vld [vmem:[#allocation11 + $0x50] sm:$0xff]
    %v408 = vld [vmem:[#allocation11 + $0x58] sm:$0xff]
    %v409 = vld [vmem:[#allocation11 + $0x60] sm:$0xff]
    %v410 = vld [vmem:[#allocation11 + $0x68] sm:$0xff]
    %v411 = vld [vmem:[#allocation11 + $0x70] sm:$0xff]
    %v412 = vld [vmem:[#allocation11 + $0x78] sm:$0xff]
    %v413 = vld [vmem:[%s9] sm:$0x1]
    %v415 = vlaneseq
    %v416 = vshrl.u32 %v415, 7
    %v417 = vsub.s32 0, %v416
    %v418 = vrot.slane %v413, %v417
    %420 = vmatprep.subr.mxu0 0.0
    %421 = vmatpush1.msra.mxu0 %v397
    %422 = vmatprep.subr.mxu0 0.0
    %423 = vmatpush1.msra.mxu0 %v398
    %424 = vmatprep.subr.mxu0 0.0
    %425 = vmatpush1.msra.mxu0 %v399
    %426 = vmatprep.subr.mxu0 0.0
    %427 = vmatpush1.msra.mxu0 %v400
    %428 = vmatprep.subr.mxu0 0.0
    %429 = vmatpush1.msra.mxu0 %v401
    %430 = vmatprep.subr.mxu0 0.0
    %431 = vmatpush1.msra.mxu0 %v402
    %432 = vmatprep.subr.mxu0 0.0
    %433 = vmatpush1.msra.mxu0 %v403
    %434 = vmatprep.subr.mxu0 0.0
    %435 = vmatpush1.msra.mxu0 %v404
    %436 = vmatprep.subr.mxu0 0.0
    %437 = vmatpush1.msra.mxu0 %v405
    %438 = vmatprep.subr.mxu0 0.0
    %439 = vmatpush1.msra.mxu0 %v406
    %440 = vmatprep.subr.mxu0 0.0
    %441 = vmatpush1.msra.mxu0 %v407
    %442 = vmatprep.subr.mxu0 0.0
    %443 = vmatpush1.msra.mxu0 %v408
    %444 = vmatprep.subr.mxu0 0.0
    %445 = vmatpush1.msra.mxu0 %v409
    %446 = vmatprep.subr.mxu0 0.0
    %447 = vmatpush1.msra.mxu0 %v410
    %448 = vmatprep.subr.mxu0 0.0
    %449 = vmatpush1.msra.mxu0 %v411
    %450 = vmatprep.subr.mxu0 0.0
    %451 = vmatpush1.msra.mxu0 %v412
    %452 = vmatprep.subr.mxu0 0.0
    %453 = vmatpush1.msra.mxu0 0.0
    %454 = vmatprep.subr.mxu0 0.0
    %455 = vmatpush1.msra.mxu0 0.0
    %456 = vmatprep.subr.mxu0 0.0
    %457 = vmatpush1.msra.mxu0 0.0
    %458 = vmatprep.subr.mxu0 0.0
    %459 = vmatpush1.msra.mxu0 0.0
    %460 = vmatprep.subr.mxu0 0.0
    %461 = vmatpush1.msra.mxu0 0.0
    %462 = vmatprep.subr.mxu0 0.0
    %463 = vmatpush1.msra.mxu0 0.0
    %464 = vmatprep.subr.mxu0 0.0
    %465 = vmatpush1.msra.mxu0 0.0
    %466 = vmatprep.subr.mxu0 0.0
    %467 = vmatpush1.msra.mxu0 0.0
    %468 = vmatprep.subr.mxu0 0.0
    %469 = vmatpush1.msra.mxu0 0.0
    %470 = vmatprep.subr.mxu0 0.0
    %471 = vmatpush1.msra.mxu0 0.0
    %472 = vmatprep.subr.mxu0 0.0
    %473 = vmatpush1.msra.mxu0 0.0
    %474 = vmatprep.subr.mxu0 0.0
    %475 = vmatpush1.msra.mxu0 0.0
    %476 = vmatprep.subr.mxu0 0.0
    %477 = vmatpush1.msra.mxu0 0.0
    %478 = vmatprep.subr.mxu0 0.0
    %479 = vmatpush1.msra.mxu0 0.0
    %480 = vmatprep.subr.mxu0 0.0
    %481 = vmatpush1.msra.mxu0 0.0
    %482 = vmatprep.subr.mxu0 0.0
    %483 = vmatpush1.msra.mxu0 0.0
    %484 = vmatprep.mubr.f32.mxu0 0.0
    %485 = vmatmul.mubr.f32.gmra.mrb[0].mxu0 %v396
    %v486 = vpop.f32.mrb[0].mxu0
    %v487 = vadd.f32 %v418, %v486
    %v488 = vpop.f32.mrb[0].mxu0
    %489 = vdwg.mxu0
    %v490 = vtanh.pop %v487
    %s491 = sld [smem:[#allocation2]]
    %v492 = vstv %s491
    %v493 = vmul.f32 %v490, %v492
    %494 = vst [vmem:[#allocation12] sm:$0xff] %v493
    // Predicated region
    $region62: #{tpu_custom_call.1} parent=1 // pred_check
      _
    $region63: #{tpu_custom_call.1} parent=1 // pred_check_branch
      %496 = sbr.rel (0) target = $region65
    $region64: #{tpu_custom_call.1} parent=1 // pred_region
      %s498 = ssub.s32 128, 128
      %499 = vsyncadd [#allocation5], %s498
      %s501 = sshll.u32 [#allocation12], 4
      %s502 = int_to_ptr.vmem [resolvable:$true] %s501
      %504 = dma.vmem_to_hbm [thread:$0]  %s502, 128, %s10, [#allocation5]
    $region65: #{tpu_custom_call.1} parent=1 // pred_fallthru
      _
    // Predicated region
    $region66: #{tpu_custom_call.1} parent=1 // pred_check
      _
    $region67: #{tpu_custom_call.1} parent=1 // pred_check_branch
      %506 = sbr.rel (0) target = $region69
    $region68: #{tpu_custom_call.1} parent=1 // pred_region
      %507 = dma.done [#allocation5], 128
    $region69: #{tpu_custom_call.1} parent=1 // pred_fallthru
      _
    %508 = vsyncpa [#allocation4], 1
    %509 = vsyncpa [#allocation7], 1
    %510 = vsyncpa [#allocation10], 1
    %511 = vsyncpa [#allocation5], 1

</llo_original>
